<compile_context>
chip_gen: v5e
topology: v5e:2x2
jax: 0.10.0
libtpu: 0.0.40
codegen_flags: <defaults>
</compile_context>

<pallas_src>
import numpy as np
import jax
import jax.numpy as jnp
from jax.experimental import pallas as pl
from jax.experimental.pallas import tpu as pltpu


def _cdiv(a, b):
    return -(-a // b)


def make_kernel_np(k):
    """Equivalent of StyleGAN2 make_kernel (numpy, deterministic)."""
    k = np.asarray(k, dtype=np.float32)
    if k.ndim == 1:
        k = k[None, :] * k[:, None]
    k = k / k.sum()
    return k


def _toeplitz_down(n_in, n_out, taps, d, pad0):
    """Banded operator T with T[i, o] = taps[i - d*o + pad0].

    Rows that would fall outside [0, n_in) are simply dropped, which
    reproduces the asymmetric (pad0, pad1) zero padding of upfirdn2d exactly.
    """
    K = taps.shape[0]
    T = np.zeros((n_in, n_out), np.float32)
    for o in range(n_out):
        for t in range(K):
            i = d * o + t - pad0
            if 0 <= i < n_in:
                T[i, o] += taps[t]
    return T


def _kron_body(x_ref, m_ref, o_ref):
    # x_ref: (bT, H*W), m_ref: (H*W, OH*OW), o_ref: (bT, OH*OW)
    x = x_ref[...].astype(jnp.float32)
    out = jax.lax.dot_general(
        x, m_ref[...],
        dimension_numbers=(((1,), (0,)), ((), ())),
        preferred_element_type=jnp.float32)
    o_ref[...] = out.astype(o_ref.dtype)


def _make_separable_body(bT, H, W, OW):
    def body(x_ref, tw_ref, th_ref, o_ref):
        # x_ref: (bT, H, W), tw_ref: (W, OW), th_ref: (bT, OH, H)
        x = x_ref[...].astype(jnp.float32)
        # W pass (blur + pad + decimate) as a plain 2-D matmul on the MXU.
        t = jax.lax.dot_general(
            x.reshape(bT * H, W), tw_ref[...],
            dimension_numbers=(((1,), (0,)), ((), ())),
            preferred_element_type=jnp.float32)          # (bT*H, OW)
        t = t.reshape(bT, H, OW)
        # H pass as a batched matmul against the broadcast column operator.
        out = jax.lax.dot_general(
            th_ref[...], t,
            dimension_numbers=(((2,), (1,)), ((0,), (0,))),
            preferred_element_type=jnp.float32)          # (bT, OH, OW)
        o_ref[...] = out.astype(o_ref.dtype)
    return body


def _vmem_budgets():
    """(vmem_limit_bytes, per-step block budget) — generation aware."""
    try:
        info = pltpu.get_tpu_info()
        cap = int(getattr(info, "vmem_capacity_bytes", 64 * 2 ** 20))
    except Exception:
        cap = 64 * 2 ** 20                 # v7x floor; safe everywhere
    if cap >= 100 * 2 ** 20:               # v5e / v6e (128 MiB physical)
        return 96 * 2 ** 20, 16 * 2 ** 20
    return 44 * 2 ** 20, 10 * 2 ** 20      # v7x (64 MiB physical)


def downsample(x, blur_kernel, factor=2, *, small_map_operator_bytes=4 * 2 ** 20):
    """Pallas implementation of StyleGAN2 Downsample.forward (NCHW in/out)."""
    k1 = np.asarray(blur_kernel, dtype=np.float32)
    if k1.ndim != 1:
        # TODO(synk): non-separable 2-D blur kernels (make_kernel accepts them)
        # would need a dense-operator / VPU fallback path.
        raise NotImplementedError("only 1-D (separable) blur kernels supported")
    d = int(factor)
    K = int(k1.shape[0])
    p = K - d
    pad0, pad1 = (p + 1) // 2, p // 2
    # flipped, normalized separable factor: kflip_2d = outer(kf, kf)
    kf = (k1 / k1.sum())[::-1].copy()

    N, C, H, W = map(int, x.shape)
    OH = (H + pad0 + pad1 - K) // d + 1
    OW = (W + pad0 + pad1 - K) // d + 1
    NC = N * C
    itemsize = np.dtype(x.dtype).itemsize

    Tw = _toeplitz_down(W, OW, kf, d, pad0)      # (W, OW)
    Th = _toeplitz_down(H, OH, kf, d, pad0)      # (H, OH)

    vmem_limit, budget = _vmem_budgets()
    kron_bytes = H * W * OH * OW * 4
    use_kron = kron_bytes <= small_map_operator_bytes

    if use_kron:
        # ---- small-map path: one fused (H*W, OH*OW) operator, one matmul ----
        mop = jnp.asarray(np.kron(Th, Tw))       # M[(ih,iw),(oh,ow)] = Th*Tw
        per = (2 * H * W * itemsize + H * W * 4
               + 2 * OH * OW * itemsize + OH * OW * 4)
        avail = max(budget - 2 * kron_bytes, per)
        bT = int(min(NC, max(1, avail // per)))
        if bT < NC:
            # 2-D blocks: second-minor dim must be 8-aligned (or the full dim).
            bT = max(8, (bT // 8) * 8)
            bT = min(bT, NC)
        grid = (_cdiv(NC, bT),)

        kernel = pl.pallas_call(
            _kron_body,
            out_shape=jax.ShapeDtypeStruct((NC, OH * OW), x.dtype),
            grid_spec=pltpu.PrefetchScalarGridSpec(
                num_scalar_prefetch=0,
                grid=grid,
                in_specs=[
                    pl.BlockSpec((bT, H * W), lambda i: (i, 0)),
                    pl.BlockSpec((H * W, OH * OW), lambda i: (0, 0)),
                ],
                out_specs=pl.BlockSpec((bT, OH * OW), lambda i: (i, 0)),
            ),
            compiler_params=pltpu.CompilerParams(
                dimension_semantics=("parallel",),
                vmem_limit_bytes=vmem_limit,
            ),
        )

        @jax.jit
        def run(xd, m):
            out = kernel(xd.reshape(NC, H * W), m)   # free HBM reshapes
            return out.reshape(N, C, OH, OW)

        return run(x, mop)

    # ---- large-map path: separable (W matmul, then batched H matmul) ----
    per = (2 * H * W * itemsize + H * W * 4 + H * OW * 4
           + 2 * OH * OW * itemsize + OH * OW * 4
           + 2 * OH * H * 4)
    fixed = 2 * W * OW * 4
    avail = max(budget - fixed, per)
    bT = int(min(NC, max(1, avail // per)))
    g = _cdiv(NC, bT)
    if g > 1 and g % 2 == 1:                     # even step count for v7x megacore
        bT = _cdiv(NC, g + 1)
    grid = (_cdiv(NC, bT),)

    tw = jnp.asarray(Tw)
    th_b = jnp.asarray(np.broadcast_to(Th.T[None], (bT, OH, H)).copy())

    kernel = pl.pallas_call(
        _make_separable_body(bT, H, W, OW),
        out_shape=jax.ShapeDtypeStruct((NC, OH, OW), x.dtype),
        grid_spec=pltpu.PrefetchScalarGridSpec(
            num_scalar_prefetch=0,
            grid=grid,
            in_specs=[
                pl.BlockSpec((bT, H, W), lambda i: (i, 0, 0)),
                pl.BlockSpec((W, OW), lambda i: (0, 0)),
                pl.BlockSpec((bT, OH, H), lambda i: (0, 0, 0)),
            ],
            out_specs=pl.BlockSpec((bT, OH, OW), lambda i: (i, 0, 0)),
        ),
        compiler_params=pltpu.CompilerParams(
            dimension_semantics=("parallel",),
            vmem_limit_bytes=vmem_limit,
        ),
    )
    # TODO(synk): for mid-size maps (OW < 128) the output store is still not
    # lane-dense; flattening (OH, OW) in-kernel could recover a few percent.

    @jax.jit
    def run(xd, tw_, th_):
        out = kernel(xd.reshape(NC, H, W), tw_, th_)
        return out.reshape(N, C, OH, OW)

    return run(x, tw, th_b)


def downsample_reference(x, blur_kernel, factor=2):
    """Plain-JAX reference (depthwise correlation with flipped kernel)."""
    k2d = make_kernel_np(blur_kernel)
    kflip = jnp.asarray(k2d[::-1, ::-1].copy())
    K = k2d.shape[0]
    d = int(factor)
    p = K - d
    pad0, pad1 = (p + 1) // 2, p // 2
    N, C, H, W = x.shape
    xpad = jnp.pad(x, ((0, 0), (0, 0), (pad0, pad1), (pad0, pad1)))
    w = jnp.broadcast_to(kflip[None, None], (C, 1, K, K)).astype(x.dtype)
    return jax.lax.conv_general_dilated(
        xpad, w, window_strides=(d, d), padding="VALID",
        dimension_numbers=("NCHW", "OIHW", "NCHW"),
        feature_group_count=C,
        precision=jax.lax.Precision.HIGHEST)


if __name__ == "__main__":
    key = jax.random.PRNGKey(0)
    blur_kernel = [1.0, 3.0, 3.0, 1.0]   # standard StyleGAN2 blur kernel
    factor = 2

    # Inputs rounded to bf16-representable values so the comparison is
    # insensitive to the MXU input precision mode (weights 1/8, 3/8 are exact).
    k1, k2 = jax.random.split(key)
    x_small = jax.random.normal(k1, (2, 4, 16, 16), dtype=jnp.float32)
    x_small = x_small.astype(jnp.bfloat16).astype(jnp.float32)
    x_large = jax.random.normal(k2, (2, 4, 32, 32), dtype=jnp.float32)
    x_large = x_large.astype(jnp.bfloat16).astype(jnp.float32)

    # 1) default (small-map / fused-operator) path
    out = jax.block_until_ready(downsample(x_small, blur_kernel, factor=factor))
    assert out.shape == (2, 4, 8, 8), out.shape
    ref = jax.block_until_ready(downsample_reference(x_small, blur_kernel, factor=factor))
    err = float(jnp.max(jnp.abs(out - ref)))
    assert err < 1e-4, err

    # 2) force the large-map (separable two-matmul) path on a small shape
    out2 = jax.block_until_ready(
        downsample(x_large, blur_kernel, factor=factor, small_map_operator_bytes=0))
    assert out2.shape == (2, 4, 16, 16), out2.shape
    ref2 = jax.block_until_ready(downsample_reference(x_large, blur_kernel, factor=factor))
    err2 = float(jnp.max(jnp.abs(out2 - ref2)))
    assert err2 < 1e-4, err2

    print("KERNEL_OK")
</pallas_src>

<mosaic_0001>
module attributes {stable_mosaic.version = 11 : i64} {
  func.func @_kron_body(%arg0: i32, %arg1: memref<8x256xf32, #tpu.memory_space<vmem>>, %arg2: memref<256x64xf32, #tpu.memory_space<vmem>>, %arg3: memref<8x64xf32, #tpu.memory_space<vmem>>) attributes {dimension_semantics = [#tpu.dimension_semantics<parallel>], iteration_bounds = array<i64: 1>, scalar_prefetch = 0 : i64, scratch_operands = 0 : i64, tpu.core_type = #tpu.core_type<tc>, window_params = [{transform_indices = @transform_0, window_bounds = array<i64: 8, 256>}, {pipeline_mode = #tpu.pipeline_mode<synchronous>, transform_indices = @transform_1, window_bounds = array<i64: 256, 64>}, {transform_indices = @transform_2, window_bounds = array<i64: 8, 64>}]} {
    %c0 = arith.constant 0 : index
    %c0_0 = arith.constant 0 : index
    %0 = vector.load %arg1[%c0, %c0_0] : memref<8x256xf32, #tpu.memory_space<vmem>>, vector<8x256xf32>
    %c0_1 = arith.constant 0 : index
    %c0_2 = arith.constant 0 : index
    %1 = vector.load %arg2[%c0_1, %c0_2] : memref<256x64xf32, #tpu.memory_space<vmem>>, vector<256x64xf32>
    %cst = arith.constant dense<0.000000e+00> : vector<8x64xf32>
    %2 = tpu.matmul %0, %1, %cst {dimension_numbers = #tpu.dot_dimension_numbers<[1], [0], [0], [1], [0, 0, 1, 1], [], []>} : vector<8x256xf32>, vector<256x64xf32>, vector<8x64xf32> -> vector<8x64xf32>
    %c0_3 = arith.constant 0 : index
    %c0_4 = arith.constant 0 : index
    %3 = vector.load %arg3[%c0_3, %c0_4] : memref<8x64xf32, #tpu.memory_space<vmem>>, vector<8x64xf32>
    tpu.vector_store %arg3[%c0_3, %c0_4], %2 {strides = array<i32>} : memref<8x64xf32, #tpu.memory_space<vmem>>, vector<8x64xf32>,
    return
  }
  func.func @transform_0(%arg0: i32) -> (i32, i32) {
    %c0_i32 = arith.constant 0 : i32
    %c0_i32_0 = arith.constant 0 : i32
    return %arg0, %c0_i32 : i32, i32
  }
  func.func @transform_1(%arg0: i32) -> (i32, i32) {
    %c0_i32 = arith.constant 0 : i32
    %c0_i32_0 = arith.constant 0 : i32
    %c0_i32_1 = arith.constant 0 : i32
    return %c0_i32, %c0_i32_0 : i32, i32
  }
  func.func @transform_2(%arg0: i32) -> (i32, i32) {
    %c0_i32 = arith.constant 0 : i32
    %c0_i32_0 = arith.constant 0 : i32
    return %arg0, %c0_i32 : i32, i32
  }
}

</mosaic_0001>

<llo_original>
// kernel: run.1
$region0: #{run.1}
  #allocation0 [shape = 'u32[]', space=smem, size = 0x4, offset = 0x4, fixed_abs, tag = 'smem constant byte address 0x4 - core index']
  #allocation1 [shape = 'u32[72,128]{1,0:T(1,128)}', space=vmem, size = 0x9000, scoped, tag = 'internal scratch']
  %s0 = inlined_call_operand.vmem [shape: f32[8,256], index: 0, kind: input, shape index: {}]
  %s1 = inlined_call_operand.vmem [shape: f32[256,64], index: 1, kind: input, shape index: {}]
  %s2 = inlined_call_operand.vmem [shape: f32[8,64], index: 2, kind: output, shape index: {}]
  %s3 = sld [smem:[#allocation0]]
  $region18: #{run.1} parent=0
    _
  %s5 = ssub.s32 1, %s3
  %s6 = scalar_select 0, %s5, %s3
  // Predicated region
  $region2: #{run.1} parent=0 // pred_check
    _
  $region3: #{run.1} parent=0 // pred_check_branch
    %8 = sbr.rel (0) target = $region5
  $region4: #{run.1} parent=0 // pred_region
    _
  $region5: #{run.1} parent=0 // pred_fallthru
    _
  // Predicated region
  $region6: #{run.1} parent=0 // pred_check
    _
  $region7: #{run.1} parent=0 // pred_check_branch
    %10 = sbr.rel (0) target = $region9
  $region8: #{run.1} parent=0 // pred_region
    _
  $region9: #{run.1} parent=0 // pred_fallthru
    _
  %v11 = vld [vmem:[%s0] sm:$0xff]
  %v12 = vld [vmem:[%s0 + $0x8] sm:$0xff]
  %v13 = vld [vmem:[%s1] sm:$0xff]
  %v14 = vld [vmem:[%s1 + $0x8] sm:$0xff]
  %v15 = vld [vmem:[%s1 + $0x10] sm:$0xff]
  %v16 = vld [vmem:[%s1 + $0x18] sm:$0xff]
  %v17 = vld [vmem:[%s1 + $0x20] sm:$0xff]
  %v18 = vld [vmem:[%s1 + $0x28] sm:$0xff]
  %v19 = vld [vmem:[%s1 + $0x30] sm:$0xff]
  %v20 = vld [vmem:[%s1 + $0x38] sm:$0xff]
  %v21 = vld [vmem:[%s1 + $0x40] sm:$0xff]
  %v22 = vld [vmem:[%s1 + $0x48] sm:$0xff]
  %v23 = vld [vmem:[%s1 + $0x50] sm:$0xff]
  %v24 = vld [vmem:[%s1 + $0x58] sm:$0xff]
  %v25 = vld [vmem:[%s1 + $0x60] sm:$0xff]
  %v26 = vld [vmem:[%s1 + $0x68] sm:$0xff]
  %v27 = vld [vmem:[%s1 + $0x70] sm:$0xff]
  %v28 = vld [vmem:[%s1 + $0x78] sm:$0xff]
  %v29 = vld [vmem:[%s1 + $0x80] sm:$0xff]
  %v30 = vld [vmem:[%s1 + $0x88] sm:$0xff]
  %v31 = vld [vmem:[%s1 + $0x90] sm:$0xff]
  %v32 = vld [vmem:[%s1 + $0x98] sm:$0xff]
  %v33 = vld [vmem:[%s1 + $0xa0] sm:$0xff]
  %v34 = vld [vmem:[%s1 + $0xa8] sm:$0xff]
  %v35 = vld [vmem:[%s1 + $0xb0] sm:$0xff]
  %v36 = vld [vmem:[%s1 + $0xb8] sm:$0xff]
  %v37 = vld [vmem:[%s1 + $0xc0] sm:$0xff]
  %v38 = vld [vmem:[%s1 + $0xc8] sm:$0xff]
  %v39 = vld [vmem:[%s1 + $0xd0] sm:$0xff]
  %v40 = vld [vmem:[%s1 + $0xd8] sm:$0xff]
  %v41 = vld [vmem:[%s1 + $0xe0] sm:$0xff]
  %v42 = vld [vmem:[%s1 + $0xe8] sm:$0xff]
  %v43 = vld [vmem:[%s1 + $0xf0] sm:$0xff]
  %v44 = vld [vmem:[%s1 + $0xf8] sm:$0xff]
  %45 = vmatpush.msra.mxu0 %v28
  %46 = vmatpush.msra.mxu0 %v27
  %47 = vmatpush.msra.mxu0 %v26
  %48 = vmatpush.msra.mxu0 %v25
  %49 = vmatpush.msra.mxu0 %v24
  %50 = vmatpush.msra.mxu0 %v23
  %51 = vmatpush.msra.mxu0 %v22
  %52 = vmatpush.msra.mxu0 %v21
  %53 = vmatpush.msra.mxu0 %v20
  %54 = vmatpush.msra.mxu0 %v19
  %55 = vmatpush.msra.mxu0 %v18
  %56 = vmatpush.msra.mxu0 %v17
  %57 = vmatpush.msra.mxu0 %v16
  %58 = vmatpush.msra.mxu0 %v15
  %59 = vmatpush.msra.mxu0 %v14
  %60 = vmatpush.msra.mxu0 %v13
  %61 = vmatmul.f32.gmra.mxu0 %v11
  %v62 = vpop.f32.mrf.mxu0
  %v63 = vadd.f32 0.0, %v62
  %64 = vdwg.mxu0
  %65 = vmatpush.msra.mxu0 %v44
  %66 = vmatpush.msra.mxu0 %v43
  %67 = vmatpush.msra.mxu0 %v42
  %68 = vmatpush.msra.mxu0 %v41
  %69 = vmatpush.msra.mxu0 %v40
  %70 = vmatpush.msra.mxu0 %v39
  %71 = vmatpush.msra.mxu0 %v38
  %72 = vmatpush.msra.mxu0 %v37
  %73 = vmatpush.msra.mxu0 %v36
  %74 = vmatpush.msra.mxu0 %v35
  %75 = vmatpush.msra.mxu0 %v34
  %76 = vmatpush.msra.mxu0 %v33
  %77 = vmatpush.msra.mxu0 %v32
  %78 = vmatpush.msra.mxu0 %v31
  %79 = vmatpush.msra.mxu0 %v30
  %80 = vmatpush.msra.mxu0 %v29
  %81 = vmatmul.f32.gmra.mxu0 %v12
  %v82 = vpop.f32.mrf.mxu0
  %v83 = vadd.f32 %v63, %v82
  %84 = vdwg.mxu0
  %vm85 = vcmask 523264
  %86 = vst.msk [vmem:[%s2] sm:$0xff] %vm85, %v83
  // Predicated region
  $region10: #{run.1} parent=0 // pred_check
    _
  $region11: #{run.1} parent=0 // pred_check_branch
    %88 = sbr.rel (0) target = $region13
  $region12: #{run.1} parent=0 // pred_region
    _
  $region13: #{run.1} parent=0 // pred_fallthru
    _
  // Predicated region
  $region14: #{run.1} parent=0 // pred_check
    _
  $region15: #{run.1} parent=0 // pred_check_branch
    %90 = sbr.rel (0) target = $region17
  $region16: #{run.1} parent=0 // pred_region
    _
  $region17: #{run.1} parent=0 // pred_fallthru
    _

</llo_original>
